<compile_context>
chip_gen: v6e
topology: v6e:2x2x1
jax: 0.10.0
libtpu: 0.0.40
codegen_flags: <defaults>
</compile_context>

<pallas_src>
import jax
import jax.numpy as jnp
from jax.experimental import pallas as pl
from jax.experimental.pallas import tpu as pltpu


def _round_up(x, m):
    return ((x + m - 1) // m) * m


# --------------------------------------------------------------------------- #
# Kernel
# --------------------------------------------------------------------------- #
def ntn_kernel(e1_ref, e2_ref, W2_ref, S_ref, V1_ref, V2_ref, b_ref, u_ref, o_ref):
    """One batch tile: 4 lane-dense MXU matmuls + EUP tanh, lane-dense output row."""
    mm_dtype = W2_ref.dtype                      # bf16 (default) or f32
    K = b_ref.shape[-1]                          # static python int

    e1_mm = e1_ref[...].astype(mm_dtype)         # (TB, L)
    e2_mm = e2_ref[...].astype(mm_dtype)         # (TB, R)
    e2_f32 = e2_ref[...].astype(jnp.float32)     # (TB, R) elementwise factor stays f32

    # Stage 1: one MXU matmul contracting L for every (k, r) pair at once.
    #   t[b, k*R + r] = sum_l e1[b, l] * W[k, l, r]
    t = jnp.dot(e1_mm, W2_ref[...], preferred_element_type=jnp.float32)   # (TB, K*R) f32

    # e2 replicated K times along lanes (single lane-concat; kept instead of
    # jnp.tile / broadcast+reshape because a lane-merging reshape with R not a
    # multiple of 128 can force a Mosaic relayout), then the bilinear
    # elementwise factor in f32.
    te2 = t * jnp.concatenate([e2_f32] * K, axis=-1)                      # (TB, K*R) f32

    # Stage 2: segment-sum over r (0/1 matrix S, exact in bf16) plus the two
    # halves of the V-linear term — three small MXU matmuls, no feat concat.
    pre = (
        jnp.dot(te2.astype(mm_dtype), S_ref[...], preferred_element_type=jnp.float32)
        + jnp.dot(e1_mm, V1_ref[...], preferred_element_type=jnp.float32)
        + jnp.dot(e2_mm, V2_ref[...], preferred_element_type=jnp.float32)
        + b_ref[...]
    )                                                                     # (TB, K) f32
    h = jnp.tanh(pre)                                                     # EUP, f32

    # Final u-projection, produced directly as a lane-dense (1, TB) row:
    #   out[0, b] = sum_k u[0, k] * h[b, k]      (NT matmul, f32 accumulate)
    out_row = jax.lax.dot_general(
        u_ref[...], h, (((1,), (1,)), ((), ())),
        preferred_element_type=jnp.float32)                               # (1, TB)
    o_ref[0] = out_row


# --------------------------------------------------------------------------- #
# One-time parameter packing (hoisted out of the per-forward path)
# --------------------------------------------------------------------------- #
def pack_ntn_params(W, W_bias, V_w, u_w, matmul_dtype=jnp.bfloat16):
    """W: (K, L, R), W_bias: (K,), V_w: (K, L+R), u_w: (1, K)."""
    K, L, R = W.shape
    f32 = jnp.float32
    # Stage-1 weight: W2[l, k*R + r] = W[k, l, r]   (lane-dense 2-D layout)
    W2 = jnp.transpose(W, (1, 0, 2)).reshape(L, K * R).astype(matmul_dtype)  # (L, K*R)
    # Segment-sum matrix (0/1, exact in bf16) and the two V halves.
    S = jnp.repeat(jnp.eye(K, dtype=f32), R, axis=0).astype(matmul_dtype)    # (K*R, K)
    V1 = V_w[:, :L].T.astype(matmul_dtype)                                   # (L, K)
    V2 = V_w[:, L:].T.astype(matmul_dtype)                                   # (R, K)
    Wb = W_bias.reshape(1, K).astype(f32)                                    # (1, K)
    u_row = u_w.reshape(1, K).astype(f32)                                    # (1, K)
    return dict(W2=W2, S=S, V1=V1, V2=V2, b=Wb, u=u_row, L=L, R=R, K=K)


# --------------------------------------------------------------------------- #
# Tile selection from a VMEM budget (valid on v5e / v6e / v7x)
# --------------------------------------------------------------------------- #
_VMEM_BUDGET = 24 * 1024 * 1024   # leaves headroom under the 32 MiB scoped limit


def _choose_batch_tile(B, L, R, K, mm_itemsize):
    # Resident weights (worst case: double-buffered if Buffered(1) unsupported).
    w_bytes = 2 * mm_itemsize * (L * K * R + K * R * K + (L + R) * K) + 64
    # Live per-batch-row bytes (t / tiled e2 / product / casts / h, counted
    # generously as f32) plus double-buffered input & output rows.
    row_bytes = 4 * (4 * K * R + 3 * (L + R) + 8 * K) + 64
    avail = max(_VMEM_BUDGET - w_bytes, 1 << 20)
    tb_fit = max(8, min(avail // row_bytes, 4096))
    if B <= 256:
        # Small batch: one (or a few) tiles; pad rows to a sublane multiple.
        return _round_up(min(B, tb_fit), 8)
    # Large batch: >= 4 grid steps (v7x megacore sharding + DMA/compute overlap)
    # with TB a multiple of 128 so every output row store is unmasked.
    tb = max(128, min(tb_fit, _round_up(-(-B // 4), 128)))
    return (tb // 128) * 128


# --------------------------------------------------------------------------- #
# pallas_call wrapper
# --------------------------------------------------------------------------- #
def _ntn_pallas_call(e1p, e2p, params, TB, grid_steps, single_buffer_weights):
    L, R, K = params["L"], params["R"], params["K"]

    if single_buffer_weights:
        # Constant index_map -> fetched once; no need to double-buffer.
        def w_spec(shape):
            return pl.BlockSpec(shape, lambda i: (0, 0),
                                pipeline_mode=pl.Buffered(1))
    else:
        def w_spec(shape):
            return pl.BlockSpec(shape, lambda i: (0, 0))

    return pl.pallas_call(
        ntn_kernel,
        out_shape=jax.ShapeDtypeStruct((grid_steps, 1, TB), jnp.float32),
        grid_spec=pltpu.PrefetchScalarGridSpec(
            num_scalar_prefetch=0,
            grid=(grid_steps,),
            in_specs=[
                pl.BlockSpec((TB, L), lambda i: (i, 0)),     # e1 tile
                pl.BlockSpec((TB, R), lambda i: (i, 0)),     # e2 tile
                w_spec((L, K * R)),                          # W2   (resident)
                w_spec((K * R, K)),                          # S    (resident)
                w_spec((L, K)),                              # V1   (resident)
                w_spec((R, K)),                              # V2   (resident)
                w_spec((1, K)),                              # bias (resident)
                w_spec((1, K)),                              # u    (resident)
            ],
            # Lane-dense output: one (1, TB) row per grid step.
            out_specs=pl.BlockSpec((1, 1, TB), lambda i: (i, 0, 0)),
        ),
        compiler_params=pltpu.CompilerParams(
            dimension_semantics=("parallel",),
            vmem_limit_bytes=32 * 1024 * 1024,
        ),
    )(e1p, e2p, params["W2"], params["S"], params["V1"], params["V2"],
      params["b"], params["u"])


def ntn_forward(e1, e2, params):
    """e1: (B, L), e2: (B, R) -> (B, 1); matches PyTorch NTN.forward."""
    B, L = e1.shape
    R = e2.shape[1]
    K = params["K"]
    assert (L, R) == (params["L"], params["R"])

    mm_itemsize = jnp.dtype(params["W2"].dtype).itemsize
    TB = _choose_batch_tile(B, L, R, K, mm_itemsize)
    Bp = _round_up(B, TB)
    if Bp != B:                                   # zero-pad; sliced off below
        e1 = jnp.pad(e1, ((0, Bp - B), (0, 0)))
        e2 = jnp.pad(e2, ((0, Bp - B), (0, 0)))
    grid_steps = Bp // TB

    if hasattr(pl, "Buffered"):
        try:
            out = _ntn_pallas_call(e1, e2, params, TB, grid_steps, True)
        except Exception:
            # pipeline_mode=pl.Buffered(1) not supported on this jax/Mosaic;
            # fall back to default (double-buffered) resident weights.
            out = _ntn_pallas_call(e1, e2, params, TB, grid_steps, False)
    else:
        out = _ntn_pallas_call(e1, e2, params, TB, grid_steps, False)

    return out.reshape(Bp)[:B].reshape(B, 1)


# --------------------------------------------------------------------------- #
# Pure-JAX reference
# --------------------------------------------------------------------------- #
def ntn_reference(e1, e2, W, W_bias, V_w, u_w):
    bil = jnp.einsum("bl,klr,br->bk", e1, W, e2) + W_bias[None, :]
    lin = jnp.concatenate([e1, e2], axis=1) @ V_w.T
    return jnp.tanh(bil + lin) @ u_w.T


if __name__ == "__main__":
    L, R, K = 32, 16, 4
    key = jax.random.PRNGKey(0)
    k1, k2, k3, k4, k5, k6, k7, k8 = jax.random.split(key, 8)

    # Deterministic synthetic parameters (roughly PyTorch-default uniform init).
    W = jax.random.uniform(k3, (K, L, R), jnp.float32, -1.0 / L, 1.0 / L)
    W_bias = jax.random.uniform(k4, (K,), jnp.float32, -1.0 / L, 1.0 / L)
    V_w = jax.random.uniform(k5, (K, L + R), jnp.float32,
                             -1.0 / (L + R) ** 0.5, 1.0 / (L + R) ** 0.5)
    u_w = jax.random.uniform(k6, (1, K), jnp.float32,
                             -1.0 / K ** 0.5, 1.0 / K ** 0.5)

    params_f32 = pack_ntn_params(W, W_bias, V_w, u_w, matmul_dtype=jnp.float32)
    params_bf16 = pack_ntn_params(W, W_bias, V_w, u_w, matmul_dtype=jnp.bfloat16)

    # --- small batch, f32 MXU operands: tight numerical check ---------------
    B = 8
    e1 = jax.random.normal(k1, (B, L), dtype=jnp.float32)
    e2 = jax.random.normal(k2, (B, R), dtype=jnp.float32)
    ref = ntn_reference(e1, e2, W, W_bias, V_w, u_w)

    out = jax.block_until_ready(ntn_forward(e1, e2, params_f32))
    assert out.shape == (B, 1)
    assert jnp.allclose(out, ref, atol=1e-4, rtol=1e-4), (out, ref)

    # --- same inputs, bf16 MXU operands (production path): bf16-level tol ---
    out_bf16 = jax.block_until_ready(ntn_forward(e1, e2, params_bf16))
    assert jnp.allclose(out_bf16, ref, atol=5e-2, rtol=5e-2), (out_bf16, ref)

    # --- larger batch: multi-step grid, 128-wide lane-dense output rows -----
    B2 = 300
    e1b = jax.random.normal(k7, (B2, L), dtype=jnp.float32)
    e2b = jax.random.normal(k8, (B2, R), dtype=jnp.float32)
    refb = ntn_reference(e1b, e2b, W, W_bias, V_w, u_w)
    outb = jax.block_until_ready(ntn_forward(e1b, e2b, params_f32))
    assert outb.shape == (B2, 1)
    assert jnp.allclose(outb, refb, atol=1e-4, rtol=1e-4), (outb, refb)

    print("KERNEL_OK")
</pallas_src>

<mosaic_0001>
module attributes {stable_mosaic.version = 11 : i64} {
  func.func @ntn_kernel(%arg0: i32, %arg1: memref<8x32xf32, #tpu.memory_space<vmem>>, %arg2: memref<8x16xf32, #tpu.memory_space<vmem>>, %arg3: memref<32x64xf32, #tpu.memory_space<vmem>>, %arg4: memref<64x4xf32, #tpu.memory_space<vmem>>, %arg5: memref<32x4xf32, #tpu.memory_space<vmem>>, %arg6: memref<16x4xf32, #tpu.memory_space<vmem>>, %arg7: memref<1x4xf32, #tpu.memory_space<vmem>>, %arg8: memref<1x4xf32, #tpu.memory_space<vmem>>, %arg9: memref<1x1x8xf32, #tpu.memory_space<vmem>>) attributes {dimension_semantics = [#tpu.dimension_semantics<parallel>], iteration_bounds = array<i64: 1>, scalar_prefetch = 0 : i64, scratch_operands = 0 : i64, tpu.core_type = #tpu.core_type<tc>, window_params = [{transform_indices = @transform_0, window_bounds = array<i64: 8, 32>}, {transform_indices = @transform_1, window_bounds = array<i64: 8, 16>}, {pipeline_mode = #tpu.pipeline_mode<synchronous>, transform_indices = @transform_2, window_bounds = array<i64: 32, 64>}, {pipeline_mode = #tpu.pipeline_mode<synchronous>, transform_indices = @transform_3, window_bounds = array<i64: 64, 4>}, {pipeline_mode = #tpu.pipeline_mode<synchronous>, transform_indices = @transform_4, window_bounds = array<i64: 32, 4>}, {pipeline_mode = #tpu.pipeline_mode<synchronous>, transform_indices = @transform_5, window_bounds = array<i64: 16, 4>}, {pipeline_mode = #tpu.pipeline_mode<synchronous>, transform_indices = @transform_6, window_bounds = array<i64: 1, 4>}, {pipeline_mode = #tpu.pipeline_mode<synchronous>, transform_indices = @transform_7, window_bounds = array<i64: 1, 4>}, {transform_indices = @transform_8, window_bounds = array<i64: 1, 1, 8>}]} {
    %c0 = arith.constant 0 : index
    %c0_0 = arith.constant 0 : index
    %0 = vector.load %arg1[%c0, %c0_0] : memref<8x32xf32, #tpu.memory_space<vmem>>, vector<8x32xf32>
    %c0_1 = arith.constant 0 : index
    %c0_2 = arith.constant 0 : index
    %1 = vector.load %arg2[%c0_1, %c0_2] : memref<8x16xf32, #tpu.memory_space<vmem>>, vector<8x16xf32>
    %c0_3 = arith.constant 0 : index
    %c0_4 = arith.constant 0 : index
    %2 = vector.load %arg2[%c0_3, %c0_4] : memref<8x16xf32, #tpu.memory_space<vmem>>, vector<8x16xf32>
    %c0_5 = arith.constant 0 : index
    %c0_6 = arith.constant 0 : index
    %3 = vector.load %arg3[%c0_5, %c0_6] : memref<32x64xf32, #tpu.memory_space<vmem>>, vector<32x64xf32>
    %cst = arith.constant dense<0.000000e+00> : vector<8x64xf32>
    %4 = tpu.matmul %0, %3, %cst {dimension_numbers = #tpu.dot_dimension_numbers<[1], [0], [0], [1], [0, 0, 1, 1], [], []>} : vector<8x32xf32>, vector<32x64xf32>, vector<8x64xf32> -> vector<8x64xf32>
    %5 = tpu.concatenate %2, %2, %2, %2 in 1 : vector<8x16xf32>, vector<8x16xf32>, vector<8x16xf32>, vector<8x16xf32> -> vector<8x64xf32>
    %6 = arith.mulf %4, %5 : vector<8x64xf32>
    %c0_7 = arith.constant 0 : index
    %c0_8 = arith.constant 0 : index
    %7 = vector.load %arg4[%c0_7, %c0_8] : memref<64x4xf32, #tpu.memory_space<vmem>>, vector<64x4xf32>
    %cst_9 = arith.constant dense<0.000000e+00> : vector<8x4xf32>
    %8 = tpu.matmul %6, %7, %cst_9 {dimension_numbers = #tpu.dot_dimension_numbers<[1], [0], [0], [1], [0, 0, 1, 1], [], []>} : vector<8x64xf32>, vector<64x4xf32>, vector<8x4xf32> -> vector<8x4xf32>
    %c0_10 = arith.constant 0 : index
    %c0_11 = arith.constant 0 : index
    %9 = vector.load %arg5[%c0_10, %c0_11] : memref<32x4xf32, #tpu.memory_space<vmem>>, vector<32x4xf32>
    %cst_12 = arith.constant dense<0.000000e+00> : vector<8x4xf32>
    %10 = tpu.matmul %0, %9, %cst_12 {dimension_numbers = #tpu.dot_dimension_numbers<[1], [0], [0], [1], [0, 0, 1, 1], [], []>} : vector<8x32xf32>, vector<32x4xf32>, vector<8x4xf32> -> vector<8x4xf32>
    %11 = arith.addf %8, %10 : vector<8x4xf32>
    %c0_13 = arith.constant 0 : index
    %c0_14 = arith.constant 0 : index
    %12 = vector.load %arg6[%c0_13, %c0_14] : memref<16x4xf32, #tpu.memory_space<vmem>>, vector<16x4xf32>
    %cst_15 = arith.constant dense<0.000000e+00> : vector<8x4xf32>
    %13 = tpu.matmul %1, %12, %cst_15 {dimension_numbers = #tpu.dot_dimension_numbers<[1], [0], [0], [1], [0, 0, 1, 1], [], []>} : vector<8x16xf32>, vector<16x4xf32>, vector<8x4xf32> -> vector<8x4xf32>
    %14 = arith.addf %11, %13 : vector<8x4xf32>
    %c0_16 = arith.constant 0 : index
    %c0_17 = arith.constant 0 : index
    %15 = vector.load %arg7[%c0_16, %c0_17] : memref<1x4xf32, #tpu.memory_space<vmem>>, vector<1x4xf32>
    %16 = vector.broadcast %15 : vector<1x4xf32> to vector<8x4xf32>
    %17 = arith.addf %14, %16 : vector<8x4xf32>
    %18 = math.tanh %17 : vector<8x4xf32>
    %c0_18 = arith.constant 0 : index
    %c0_19 = arith.constant 0 : index
    %19 = vector.load %arg8[%c0_18, %c0_19] : memref<1x4xf32, #tpu.memory_space<vmem>>, vector<1x4xf32>
    %cst_20 = arith.constant dense<0.000000e+00> : vector<1x8xf32>
    %20 = tpu.matmul %19, %18, %cst_20 {dimension_numbers = #tpu.dot_dimension_numbers<[1], [1], [0], [0], [0, 0, 1, 0], [], []>} : vector<1x4xf32>, vector<8x4xf32>, vector<1x8xf32> -> vector<1x8xf32>
    %c0_21 = arith.constant 0 : index
    %c0_22 = arith.constant 0 : index
    %c0_23 = arith.constant 0 : index
    %21 = vector.load %arg9[%c0_21, %c0_22, %c0_23] : memref<1x1x8xf32, #tpu.memory_space<vmem>>, vector<1x1x8xf32>
    %22 = vector.shape_cast %21 : vector<1x1x8xf32> to vector<1x8xf32>
    %23 = vector.shape_cast %20 : vector<1x8xf32> to vector<1x1x8xf32>
    tpu.vector_store %arg9[%c0_21, %c0_22, %c0_23], %23 {strides = array<i32>} : memref<1x1x8xf32, #tpu.memory_space<vmem>>, vector<1x1x8xf32>,
    return
  }
  func.func @transform_0(%arg0: i32) -> (i32, i32) {
    %c0_i32 = arith.constant 0 : i32
    %c0_i32_0 = arith.constant 0 : i32
    return %arg0, %c0_i32 : i32, i32
  }
  func.func @transform_1(%arg0: i32) -> (i32, i32) {
    %c0_i32 = arith.constant 0 : i32
    %c0_i32_0 = arith.constant 0 : i32
    return %arg0, %c0_i32 : i32, i32
  }
  func.func @transform_2(%arg0: i32) -> (i32, i32) {
    %c0_i32 = arith.constant 0 : i32
    %c0_i32_0 = arith.constant 0 : i32
    %c0_i32_1 = arith.constant 0 : i32
    return %c0_i32, %c0_i32_0 : i32, i32
  }
  func.func @transform_3(%arg0: i32) -> (i32, i32) {
    %c0_i32 = arith.constant 0 : i32
    %c0_i32_0 = arith.constant 0 : i32
    %c0_i32_1 = arith.constant 0 : i32
    return %c0_i32, %c0_i32_0 : i32, i32
  }
  func.func @transform_4(%arg0: i32) -> (i32, i32) {
    %c0_i32 = arith.constant 0 : i32
    %c0_i32_0 = arith.constant 0 : i32
    %c0_i32_1 = arith.constant 0 : i32
    return %c0_i32, %c0_i32_0 : i32, i32
  }
  func.func @transform_5(%arg0: i32) -> (i32, i32) {
    %c0_i32 = arith.constant 0 : i32
    %c0_i32_0 = arith.constant 0 : i32
    %c0_i32_1 = arith.constant 0 : i32
    return %c0_i32, %c0_i32_0 : i32, i32
  }
  func.func @transform_6(%arg0: i32) -> (i32, i32) {
    %c0_i32 = arith.constant 0 : i32
    %c0_i32_0 = arith.constant 0 : i32
    %c0_i32_1 = arith.constant 0 : i32
    return %c0_i32, %c0_i32_0 : i32, i32
  }
  func.func @transform_7(%arg0: i32) -> (i32, i32) {
    %c0_i32 = arith.constant 0 : i32
    %c0_i32_0 = arith.constant 0 : i32
    %c0_i32_1 = arith.constant 0 : i32
    return %c0_i32, %c0_i32_0 : i32, i32
  }
  func.func @transform_8(%arg0: i32) -> (i32, i32, i32) {
    %c0_i32 = arith.constant 0 : i32
    %c0_i32_0 = arith.constant 0 : i32
    %c0_i32_1 = arith.constant 0 : i32
    return %arg0, %c0_i32, %c0_i32_0 : i32, i32, i32
  }
}

module attributes {stable_mosaic.version = 11 : i64} {
  func.func @ntn_kernel(%arg0: i32, %arg1: memref<8x32xf32, #tpu.memory_space<vmem>>, %arg2: memref<8x16xf32, #tpu.memory_space<vmem>>, %arg3: memref<32x64xf32, #tpu.memory_space<vmem>>, %arg4: memref<64x4xf32, #tpu.memory_space<vmem>>, %arg5: memref<32x4xf32, #tpu.memory_space<vmem>>, %arg6: memref<16x4xf32, #tpu.memory_space<vmem>>, %arg7: memref<1x4xf32, #tpu.memory_space<vmem>>, %arg8: memref<1x4xf32, #tpu.memory_space<vmem>>, %arg9: memref<1x1x8xf32, #tpu.memory_space<vmem>>) attributes {dimension_semantics = [#tpu.dimension_semantics<parallel>], iteration_bounds = array<i64: 1>, scalar_prefetch = 0 : i64, scratch_operands = 0 : i64, tpu.core_type = #tpu.core_type<tc>, window_params = [{transform_indices = @transform_0, window_bounds = array<i64: 8, 32>}, {transform_indices = @transform_1, window_bounds = array<i64: 8, 16>}, {pipeline_mode = #tpu.pipeline_mode<synchronous>, transform_indices = @transform_2, window_bounds = array<i64: 32, 64>}, {pipeline_mode = #tpu.pipeline_mode<synchronous>, transform_indices = @transform_3, window_bounds = array<i64: 64, 4>}, {pipeline_mode = #tpu.pipeline_mode<synchronous>, transform_indices = @transform_4, window_bounds = array<i64: 32, 4>}, {pipeline_mode = #tpu.pipeline_mode<synchronous>, transform_indices = @transform_5, window_bounds = array<i64: 16, 4>}, {pipeline_mode = #tpu.pipeline_mode<synchronous>, transform_indices = @transform_6, window_bounds = array<i64: 1, 4>}, {pipeline_mode = #tpu.pipeline_mode<synchronous>, transform_indices = @transform_7, window_bounds = array<i64: 1, 4>}, {transform_indices = @transform_8, window_bounds = array<i64: 1, 1, 8>}]} {
    %c0 = arith.constant 0 : index
    %c0_0 = arith.constant 0 : index
    %0 = vector.load %arg1[%c0, %c0_0] : memref<8x32xf32, #tpu.memory_space<vmem>>, vector<8x32xf32>
    %c0_1 = arith.constant 0 : index
    %c0_2 = arith.constant 0 : index
    %1 = vector.load %arg2[%c0_1, %c0_2] : memref<8x16xf32, #tpu.memory_space<vmem>>, vector<8x16xf32>
    %c0_3 = arith.constant 0 : index
    %c0_4 = arith.constant 0 : index
    %2 = vector.load %arg2[%c0_3, %c0_4] : memref<8x16xf32, #tpu.memory_space<vmem>>, vector<8x16xf32>
    %c0_5 = arith.constant 0 : index
    %c0_6 = arith.constant 0 : index
    %3 = vector.load %arg3[%c0_5, %c0_6] : memref<32x64xf32, #tpu.memory_space<vmem>>, vector<32x64xf32>
    %cst = arith.constant dense<0.000000e+00> : vector<8x64xf32>
    %4 = tpu.matmul %0, %3, %cst {dimension_numbers = #tpu.dot_dimension_numbers<[1], [0], [0], [1], [0, 0, 1, 1], [], []>} : vector<8x32xf32>, vector<32x64xf32>, vector<8x64xf32> -> vector<8x64xf32>
    %5 = tpu.concatenate %2, %2, %2, %2 in 1 : vector<8x16xf32>, vector<8x16xf32>, vector<8x16xf32>, vector<8x16xf32> -> vector<8x64xf32>
    %6 = arith.mulf %4, %5 : vector<8x64xf32>
    %c0_7 = arith.constant 0 : index
    %c0_8 = arith.constant 0 : index
    %7 = vector.load %arg4[%c0_7, %c0_8] : memref<64x4xf32, #tpu.memory_space<vmem>>, vector<64x4xf32>
    %cst_9 = arith.constant dense<0.000000e+00> : vector<8x4xf32>
    %8 = tpu.matmul %6, %7, %cst_9 {dimension_numbers = #tpu.dot_dimension_numbers<[1], [0], [0], [1], [0, 0, 1, 1], [], []>} : vector<8x64xf32>, vector<64x4xf32>, vector<8x4xf32> -> vector<8x4xf32>
    %c0_10 = arith.constant 0 : index
    %c0_11 = arith.constant 0 : index
    %9 = vector.load %arg5[%c0_10, %c0_11] : memref<32x4xf32, #tpu.memory_space<vmem>>, vector<32x4xf32>
    %cst_12 = arith.constant dense<0.000000e+00> : vector<8x4xf32>
    %10 = tpu.matmul %0, %9, %cst_12 {dimension_numbers = #tpu.dot_dimension_numbers<[1], [0], [0], [1], [0, 0, 1, 1], [], []>} : vector<8x32xf32>, vector<32x4xf32>, vector<8x4xf32> -> vector<8x4xf32>
    %11 = arith.addf %8, %10 : vector<8x4xf32>
    %c0_13 = arith.constant 0 : index
    %c0_14 = arith.constant 0 : index
    %12 = vector.load %arg6[%c0_13, %c0_14] : memref<16x4xf32, #tpu.memory_space<vmem>>, vector<16x4xf32>
    %cst_15 = arith.constant dense<0.000000e+00> : vector<8x4xf32>
    %13 = tpu.matmul %1, %12, %cst_15 {dimension_numbers = #tpu.dot_dimension_numbers<[1], [0], [0], [1], [0, 0, 1, 1], [], []>} : vector<8x16xf32>, vector<16x4xf32>, vector<8x4xf32> -> vector<8x4xf32>
    %14 = arith.addf %11, %13 : vector<8x4xf32>
    %c0_16 = arith.constant 0 : index
    %c0_17 = arith.constant 0 : index
    %15 = vector.load %arg7[%c0_16, %c0_17] : memref<1x4xf32, #tpu.memory_space<vmem>>, vector<1x4xf32>
    %16 = vector.broadcast %15 : vector<1x4xf32> to vector<8x4xf32>
    %17 = arith.addf %14, %16 : vector<8x4xf32>
    %18 = math.tanh %17 : vector<8x4xf32>
    %c0_18 = arith.constant 0 : index
    %c0_19 = arith.constant 0 : index
    %19 = vector.load %arg8[%c0_18, %c0_19] : memref<1x4xf32, #tpu.memory_space<vmem>>, vector<1x4xf32>
    %cst_20 = arith.constant dense<0.000000e+00> : vector<1x8xf32>
    %20 = tpu.matmul %19, %18, %cst_20 {dimension_numbers = #tpu.dot_dimension_numbers<[1], [1], [0], [0], [0, 0, 1, 0], [], []>} : vector<1x4xf32>, vector<8x4xf32>, vector<1x8xf32> -> vector<1x8xf32>
    %c0_21 = arith.constant 0 : index
    %c0_22 = arith.constant 0 : index
    %c0_23 = arith.constant 0 : index
    %21 = vector.load %arg9[%c0_21, %c0_22, %c0_23] : memref<1x1x8xf32, #tpu.memory_space<vmem>>, vector<1x1x8xf32>
    %22 = vector.shape_cast %21 : vector<1x1x8xf32> to vector<1x8xf32>
    %23 = vector.shape_cast %20 : vector<1x8xf32> to vector<1x1x8xf32>
    tpu.vector_store %arg9[%c0_21, %c0_22, %c0_23], %23 {strides = array<i32>} : memref<1x1x8xf32, #tpu.memory_space<vmem>>, vector<1x1x8xf32>,
    return
  }
  func.func @transform_0(%arg0: i32) -> (i32, i32) {
    %c0_i32 = arith.constant 0 : i32
    %c0_i32_0 = arith.constant 0 : i32
    return %arg0, %c0_i32 : i32, i32
  }
  func.func @transform_1(%arg0: i32) -> (i32, i32) {
    %c0_i32 = arith.constant 0 : i32
    %c0_i32_0 = arith.constant 0 : i32
    return %arg0, %c0_i32 : i32, i32
  }
  func.func @transform_2(%arg0: i32) -> (i32, i32) {
    %c0_i32 = arith.constant 0 : i32
    %c0_i32_0 = arith.constant 0 : i32
    %c0_i32_1 = arith.constant 0 : i32
    return %c0_i32, %c0_i32_0 : i32, i32
  }
  func.func @transform_3(%arg0: i32) -> (i32, i32) {
    %c0_i32 = arith.constant 0 : i32
    %c0_i32_0 = arith.constant 0 : i32
    %c0_i32_1 = arith.constant 0 : i32
    return %c0_i32, %c0_i32_0 : i32, i32
  }
  func.func @transform_4(%arg0: i32) -> (i32, i32) {
    %c0_i32 = arith.constant 0 : i32
    %c0_i32_0 = arith.constant 0 : i32
    %c0_i32_1 = arith.constant 0 : i32
    return %c0_i32, %c0_i32_0 : i32, i32
  }
  func.func @transform_5(%arg0: i32) -> (i32, i32) {
    %c0_i32 = arith.constant 0 : i32
    %c0_i32_0 = arith.constant 0 : i32
    %c0_i32_1 = arith.constant 0 : i32
    return %c0_i32, %c0_i32_0 : i32, i32
  }
  func.func @transform_6(%arg0: i32) -> (i32, i32) {
    %c0_i32 = arith.constant 0 : i32
    %c0_i32_0 = arith.constant 0 : i32
    %c0_i32_1 = arith.constant 0 : i32
    return %c0_i32, %c0_i32_0 : i32, i32
  }
  func.func @transform_7(%arg0: i32) -> (i32, i32) {
    %c0_i32 = arith.constant 0 : i32
    %c0_i32_0 = arith.constant 0 : i32
    %c0_i32_1 = arith.constant 0 : i32
    return %c0_i32, %c0_i32_0 : i32, i32
  }
  func.func @transform_8(%arg0: i32) -> (i32, i32, i32) {
    %c0_i32 = arith.constant 0 : i32
    %c0_i32_0 = arith.constant 0 : i32
    %c0_i32_1 = arith.constant 0 : i32
    return %arg0, %c0_i32, %c0_i32_0 : i32, i32, i32
  }
}

</mosaic_0001>

<llo_original>
// kernel: tpu_custom_call.1
$region0: #{tpu_custom_call.1}
  #allocation0 [shape = 'u32[]', space=smem, size = 0x4, offset = 0x4, fixed_abs, tag = 'smem constant byte address 0x4 - core index']
  #allocation1 [shape = 'u32[144,128]{1,0:T(1,128)}', space=vmem, size = 0x12000, scoped, tag = 'internal scratch']
  %s0 = inlined_call_operand.vmem [shape: f32[8,32], index: 0, kind: input, shape index: {}]
  %s1 = inlined_call_operand.vmem [shape: f32[8,16], index: 1, kind: input, shape index: {}]
  %s2 = inlined_call_operand.vmem [shape: f32[32,64], index: 2, kind: input, shape index: {}]
  %s3 = inlined_call_operand.vmem [shape: f32[64,4], index: 3, kind: input, shape index: {}]
  %s4 = inlined_call_operand.vmem [shape: f32[32,4], index: 4, kind: input, shape index: {}]
  %s5 = inlined_call_operand.vmem [shape: f32[16,4], index: 5, kind: input, shape index: {}]
  %s6 = inlined_call_operand.vmem [shape: f32[1,4], index: 6, kind: input, shape index: {}]
  %s7 = inlined_call_operand.vmem [shape: f32[1,4], index: 7, kind: input, shape index: {}]
  %s8 = inlined_call_operand.hbm [shape: f32[1,1,8], index: 8, kind: output, shape index: {}]
  %s9 = sld [smem:[#allocation0]]
  $region42: #{tpu_custom_call.1} parent=0
    _
  %s11 = ssub.s32 1, %s9
  %s12 = scalar_select 0, %s11, %s9
  $region1: #{tpu_custom_call.1} parent=0
    #allocation2 [shape = 'u8[512]{0}', space=vmem, size = 0x400, scoped, tag = 'output window, operand 0, single buffered']
    #allocation3 [shape = 's32[1]{0}', space=sflag, size = 0x4, scoped, tag = 'scoped memory for tpu_custom_call.1']
    %13 = vsyncpa [#allocation3], 0
    // Predicated region
    $region2: #{tpu_custom_call.1} parent=1 // pred_check
      _
    $region3: #{tpu_custom_call.1} parent=1 // pred_check_branch
      %15 = sbr.rel (0) target = $region5
    $region4: #{tpu_custom_call.1} parent=1 // pred_region
      _
    $region5: #{tpu_custom_call.1} parent=1 // pred_fallthru
      _
    // Predicated region
    $region6: #{tpu_custom_call.1} parent=1 // pred_check
      _
    $region7: #{tpu_custom_call.1} parent=1 // pred_check_branch
      %17 = sbr.rel (0) target = $region9
    $region8: #{tpu_custom_call.1} parent=1 // pred_region
      _
    $region9: #{tpu_custom_call.1} parent=1 // pred_fallthru
      _
    // Predicated region
    $region10: #{tpu_custom_call.1} parent=1 // pred_check
      _
    $region11: #{tpu_custom_call.1} parent=1 // pred_check_branch
      %19 = sbr.rel (0) target = $region13
    $region12: #{tpu_custom_call.1} parent=1 // pred_region
      _
    $region13: #{tpu_custom_call.1} parent=1 // pred_fallthru
      _
    // Predicated region
    $region14: #{tpu_custom_call.1} parent=1 // pred_check
      _
    $region15: #{tpu_custom_call.1} parent=1 // pred_check_branch
      %21 = sbr.rel (0) target = $region17
    $region16: #{tpu_custom_call.1} parent=1 // pred_region
      _
    $region17: #{tpu_custom_call.1} parent=1 // pred_fallthru
      _
    // Predicated region
    $region18: #{tpu_custom_call.1} parent=1 // pred_check
      _
    $region19: #{tpu_custom_call.1} parent=1 // pred_check_branch
      %23 = sbr.rel (0) target = $region21
    $region20: #{tpu_custom_call.1} parent=1 // pred_region
      _
    $region21: #{tpu_custom_call.1} parent=1 // pred_fallthru
      _
    // Predicated region
    $region22: #{tpu_custom_call.1} parent=1 // pred_check
      _
    $region23: #{tpu_custom_call.1} parent=1 // pred_check_branch
      %25 = sbr.rel (0) target = $region25
    $region24: #{tpu_custom_call.1} parent=1 // pred_region
      _
    $region25: #{tpu_custom_call.1} parent=1 // pred_fallthru
      _
    // Predicated region
    $region26: #{tpu_custom_call.1} parent=1 // pred_check
      _
    $region27: #{tpu_custom_call.1} parent=1 // pred_check_branch
      %27 = sbr.rel (0) target = $region29
    $region28: #{tpu_custom_call.1} parent=1 // pred_region
      _
    $region29: #{tpu_custom_call.1} parent=1 // pred_fallthru
      _
    // Predicated region
    $region30: #{tpu_custom_call.1} parent=1 // pred_check
      _
    $region31: #{tpu_custom_call.1} parent=1 // pred_check_branch
      %29 = sbr.rel (0) target = $region33
    $region32: #{tpu_custom_call.1} parent=1 // pred_region
      _
    $region33: #{tpu_custom_call.1} parent=1 // pred_fallthru
      _
    %v30 = vld [vmem:[%s0] sm:$0xff]
    %v31 = vld [vmem:[%s1] sm:$0xff]
    %v32 = vld [vmem:[%s2] sm:$0xff]
    %v33 = vld [vmem:[%s2 + $0x8] sm:$0xff]
    %v34 = vld [vmem:[%s2 + $0x10] sm:$0xff]
    %v35 = vld [vmem:[%s2 + $0x18] sm:$0xff]
    %vm36 = vcmask 261120
    %v38 = vsel %vm36, %v30, 0
    %40 = vmatprep.subr.mxu0 0.0
    %41 = vmatpush1.msra.mxu0 0.0
    %42 = vmatprep.subr.mxu0 0.0
    %43 = vmatpush1.msra.mxu0 0.0
    %44 = vmatprep.subr.mxu0 0.0
    %45 = vmatpush1.msra.mxu0 0.0
    %46 = vmatprep.subr.mxu0 0.0
    %47 = vmatpush1.msra.mxu0 0.0
    %48 = vmatprep.subr.mxu0 0.0
    %49 = vmatpush1.msra.mxu0 0.0
    %50 = vmatprep.subr.mxu0 0.0
    %51 = vmatpush1.msra.mxu0 0.0
    %52 = vmatprep.subr.mxu0 0.0
    %53 = vmatpush1.msra.mxu0 0.0
    %54 = vmatprep.subr.mxu0 0.0
    %55 = vmatpush1.msra.mxu0 0.0
    %56 = vmatprep.subr.mxu0 0.0
    %57 = vmatpush1.msra.mxu0 0.0
    %58 = vmatprep.subr.mxu0 0.0
    %59 = vmatpush1.msra.mxu0 0.0
    %60 = vmatprep.subr.mxu0 0.0
    %61 = vmatpush1.msra.mxu0 0.0
    %62 = vmatprep.subr.mxu0 0.0
    %63 = vmatpush1.msra.mxu0 0.0
    %64 = vmatprep.subr.mxu0 0.0
    %65 = vmatpush1.msra.mxu0 %v35
    %66 = vmatprep.subr.mxu0 0.0
    %67 = vmatpush1.msra.mxu0 %v34
    %68 = vmatprep.subr.mxu0 0.0
    %69 = vmatpush1.msra.mxu0 %v33
    %70 = vmatprep.subr.mxu0 0.0
    %71 = vmatpush1.msra.mxu0 %v32
    %72 = vmatprep.subr.mxu0 0.0
    %73 = vmatpush2.msra.mxu0 0.0
    %74 = vmatprep.subr.mxu0 0.0
    %75 = vmatpush2.msra.mxu0 0.0
    %76 = vmatprep.subr.mxu0 0.0
    %77 = vmatpush2.msra.mxu0 0.0
    %78 = vmatprep.subr.mxu0 0.0
    %79 = vmatpush2.msra.mxu0 0.0
    %80 = vmatprep.subr.mxu0 0.0
    %81 = vmatpush2.msra.mxu0 0.0
    %82 = vmatprep.subr.mxu0 0.0
    %83 = vmatpush2.msra.mxu0 0.0
    %84 = vmatprep.subr.mxu0 0.0
    %85 = vmatpush2.msra.mxu0 0.0
    %86 = vmatprep.subr.mxu0 0.0
    %87 = vmatpush2.msra.mxu0 0.0
    %88 = vmatprep.subr.mxu0 0.0
    %89 = vmatpush2.msra.mxu0 0.0
    %90 = vmatprep.subr.mxu0 0.0
    %91 = vmatpush2.msra.mxu0 0.0
    %92 = vmatprep.subr.mxu0 0.0
    %93 = vmatpush2.msra.mxu0 0.0
    %94 = vmatprep.subr.mxu0 0.0
    %95 = vmatpush2.msra.mxu0 0.0
    %96 = vmatprep.subr.mxu0 0.0
    %97 = vmatpush2.msra.mxu0 0.0
    %98 = vmatprep.subr.mxu0 0.0
    %99 = vmatpush2.msra.mxu0 0.0
    %100 = vmatprep.subr.mxu0 0.0
    %101 = vmatpush2.msra.mxu0 0.0
    %102 = vmatprep.subr.mxu0 0.0
    %103 = vmatpush2.msra.mxu0 0.0
    %104 = vmatprep.mubr.f32.mxu0 0.0
    %105 = vmatmul.mubr.f32.gmra.mxu0 %v38
    %v106 = vpop.f32.mrf.mxu0
    %v107 = vadd.f32 0.0, %v106
    %v108 = vpop.f32.mrf.mxu0
    %109 = vdwg.mxu0
    %111 = vrot.lane.b32.xlu0 %v31, 16
    %v112 = vpop.permute.xlu0 %111
    %114 = vrot.lane.b32.xlu0 %v31, 32
    %v115 = vpop.permute.xlu0 %114
    %117 = vrot.lane.b32.xlu0 %v31, 48
    %v118 = vpop.permute.xlu0 %117
    %vm120 = vcmask 130048
    %v121 = vsel %vm120, %v31, %v112
    %v122 = vsel %vm36, %v121, %v115
    %vm123 = vcmask 392192
    %v124 = vsel %vm123, %v122, %v118
    %v125 = vmul.f32 %v107, %v124
    %v126 = vld [vmem:[%s3] sm:$0xff]
    %v127 = vld [vmem:[%s3 + $0x8] sm:$0xff]
    %v128 = vld [vmem:[%s3 + $0x10] sm:$0xff]
    %v129 = vld [vmem:[%s3 + $0x18] sm:$0xff]
    %v130 = vld [vmem:[%s3 + $0x20] sm:$0xff]
    %v131 = vld [vmem:[%s3 + $0x28] sm:$0xff]
    %v132 = vld [vmem:[%s3 + $0x30] sm:$0xff]
    %v133 = vld [vmem:[%s3 + $0x38] sm:$0xff]
    %v134 = vld [vmem:[%s4] sm:$0xff]
    %v135 = vld [vmem:[%s4 + $0x8] sm:$0xff]
    %v136 = vld [vmem:[%s4 + $0x10] sm:$0xff]
    %v137 = vld [vmem:[%s4 + $0x18] sm:$0xff]
    %138 = vmatprep.subr.mxu0 0.0
    %139 = vmatpush1.msra.mxu0 0.0
    %140 = vmatprep.subr.mxu0 0.0
    %141 = vmatpush1.msra.mxu0 0.0
    %142 = vmatprep.subr.mxu0 0.0
    %143 = vmatpush1.msra.mxu0 0.0
    %144 = vmatprep.subr.mxu0 0.0
    %145 = vmatpush1.msra.mxu0 0.0
    %146 = vmatprep.subr.mxu0 0.0
    %147 = vmatpush1.msra.mxu0 0.0
    %148 = vmatprep.subr.mxu0 0.0
    %149 = vmatpush1.msra.mxu0 0.0
    %150 = vmatprep.subr.mxu0 0.0
    %151 = vmatpush1.msra.mxu0 0.0
    %152 = vmatprep.subr.mxu0 0.0
    %153 = vmatpush1.msra.mxu0 0.0
    %154 = vmatprep.subr.mxu0 0.0
    %155 = vmatpush1.msra.mxu0 0.0
    %156 = vmatprep.subr.mxu0 0.0
    %157 = vmatpush1.msra.mxu0 0.0
    %158 = vmatprep.subr.mxu0 0.0
    %159 = vmatpush1.msra.mxu0 0.0
    %160 = vmatprep.subr.mxu0 0.0
    %161 = vmatpush1.msra.mxu0 0.0
    %162 = vmatprep.subr.mxu0 0.0
    %163 = vmatpush1.msra.mxu0 %v137
    %164 = vmatprep.subr.mxu0 0.0
    %165 = vmatpush1.msra.mxu0 %v136
    %166 = vmatprep.subr.mxu0 0.0
    %167 = vmatpush1.msra.mxu0 %v135
    %168 = vmatprep.subr.mxu0 0.0
    %169 = vmatpush1.msra.mxu0 %v134
    %170 = vmatprep.subr.mxu0 0.0
    %171 = vmatpush2.msra.mxu0 0.0
    %172 = vmatprep.subr.mxu0 0.0
    %173 = vmatpush2.msra.mxu0 0.0
    %174 = vmatprep.subr.mxu0 0.0
    %175 = vmatpush2.msra.mxu0 0.0
    %176 = vmatprep.subr.mxu0 0.0
    %177 = vmatpush2.msra.mxu0 0.0
    %178 = vmatprep.subr.mxu0 0.0
    %179 = vmatpush2.msra.mxu0 0.0
    %180 = vmatprep.subr.mxu0 0.0
    %181 = vmatpush2.msra.mxu0 0.0
    %182 = vmatprep.subr.mxu0 0.0
    %183 = vmatpush2.msra.mxu0 0.0
    %184 = vmatprep.subr.mxu0 0.0
    %185 = vmatpush2.msra.mxu0 0.0
    %186 = vmatprep.subr.mxu0 0.0
    %187 = vmatpush2.msra.mxu0 0.0
    %188 = vmatprep.subr.mxu0 0.0
    %189 = vmatpush2.msra.mxu0 0.0
    %190 = vmatprep.subr.mxu0 0.0
    %191 = vmatpush2.msra.mxu0 0.0
    %192 = vmatprep.subr.mxu0 0.0
    %193 = vmatpush2.msra.mxu0 0.0
    %194 = vmatprep.subr.mxu0 0.0
    %195 = vmatpush2.msra.mxu0 0.0
    %196 = vmatprep.subr.mxu0 0.0
    %197 = vmatpush2.msra.mxu0 0.0
    %198 = vmatprep.subr.mxu0 0.0
    %199 = vmatpush2.msra.mxu0 0.0
    %200 = vmatprep.subr.mxu0 0.0
    %201 = vmatpush2.msra.mxu0 0.0
    %202 = vmatprep.mubr.f32.mxu0 0.0
    %203 = vmatmul.mubr.f32.gmra.mxu0 %v38
    %v204 = vpop.f32.mrf.mxu0
    %v205 = vadd.f32 0.0, %v204
    %v206 = vpop.f32.mrf.mxu0
    %207 = vdwg.mxu0
    %vm208 = vcmask 523264
    %v210 = vsel %vm208, %v125, 0
    %212 = vmatprep.subr.mxu0 0.0
    %213 = vmatpush1.msra.mxu0 0.0
    %214 = vmatprep.subr.mxu0 0.0
    %215 = vmatpush1.msra.mxu0 0.0
    %216 = vmatprep.subr.mxu0 0.0
    %217 = vmatpush1.msra.mxu0 0.0
    %218 = vmatprep.subr.mxu0 0.0
    %219 = vmatpush1.msra.mxu0 0.0
    %220 = vmatprep.subr.mxu0 0.0
    %221 = vmatpush1.msra.mxu0 0.0
    %222 = vmatprep.subr.mxu0 0.0
    %223 = vmatpush1.msra.mxu0 0.0
    %224 = vmatprep.subr.mxu0 0.0
    %225 = vmatpush1.msra.mxu0 0.0
    %226 = vmatprep.subr.mxu0 0.0
    %227 = vmatpush1.msra.mxu0 0.0
    %228 = vmatprep.subr.mxu0 0.0
    %229 = vmatpush1.msra.mxu0 %v133
    %230 = vmatprep.subr.mxu0 0.0
    %231 = vmatpush1.msra.mxu0 %v132
    %232 = vmatprep.subr.mxu0 0.0
    %233 = vmatpush1.msra.mxu0 %v131
    %234 = vmatprep.subr.mxu0 0.0
    %235 = vmatpush1.msra.mxu0 %v130
    %236 = vmatprep.subr.mxu0 0.0
    %237 = vmatpush1.msra.mxu0 %v129
    %238 = vmatprep.subr.mxu0 0.0
    %239 = vmatpush1.msra.mxu0 %v128
    %240 = vmatprep.subr.mxu0 0.0
    %241 = vmatpush1.msra.mxu0 %v127
    %242 = vmatprep.subr.mxu0 0.0
    %243 = vmatpush1.msra.mxu0 %v126
    %244 = vmatprep.subr.mxu0 0.0
    %245 = vmatpush2.msra.mxu0 0.0
    %246 = vmatprep.subr.mxu0 0.0
    %247 = vmatpush2.msra.mxu0 0.0
    %248 = vmatprep.subr.mxu0 0.0
    %249 = vmatpush2.msra.mxu0 0.0
    %250 = vmatprep.subr.mxu0 0.0
    %251 = vmatpush2.msra.mxu0 0.0
    %252 = vmatprep.subr.mxu0 0.0
    %253 = vmatpush2.msra.mxu0 0.0
    %254 = vmatprep.subr.mxu0 0.0
    %255 = vmatpush2.msra.mxu0 0.0
    %256 = vmatprep.subr.mxu0 0.0
    %257 = vmatpush2.msra.mxu0 0.0
    %258 = vmatprep.subr.mxu0 0.0
    %259 = vmatpush2.msra.mxu0 0.0
    %260 = vmatprep.subr.mxu0 0.0
    %261 = vmatpush2.msra.mxu0 0.0
    %262 = vmatprep.subr.mxu0 0.0
    %263 = vmatpush2.msra.mxu0 0.0
    %264 = vmatprep.subr.mxu0 0.0
    %265 = vmatpush2.msra.mxu0 0.0
    %266 = vmatprep.subr.mxu0 0.0
    %267 = vmatpush2.msra.mxu0 0.0
    %268 = vmatprep.subr.mxu0 0.0
    %269 = vmatpush2.msra.mxu0 0.0
    %270 = vmatprep.subr.mxu0 0.0
    %271 = vmatpush2.msra.mxu0 0.0
    %272 = vmatprep.subr.mxu0 0.0
    %273 = vmatpush2.msra.mxu0 0.0
    %274 = vmatprep.subr.mxu0 0.0
    %275 = vmatpush2.msra.mxu0 0.0
    %276 = vmatprep.mubr.f32.mxu0 0.0
    %277 = vmatmul.mubr.f32.gmra.mxu0 %v210
    %v278 = vpop.f32.mrf.mxu0
    %v279 = vadd.f32 %v205, %v278
    %v280 = vpop.f32.mrf.mxu0
    %281 = vdwg.mxu0
    %v282 = vld [vmem:[%s5] sm:$0xff]
    %v283 = vld [vmem:[%s5 + $0x8] sm:$0xff]
    %v284 = vsel %vm120, %v31, 0
    %286 = vmatprep.subr.mxu0 0.0
    %287 = vmatpush1.msra.mxu0 0.0
    %288 = vmatprep.subr.mxu0 0.0
    %289 = vmatpush1.msra.mxu0 0.0
    %290 = vmatprep.subr.mxu0 0.0
    %291 = vmatpush1.msra.mxu0 0.0
    %292 = vmatprep.subr.mxu0 0.0
    %293 = vmatpush1.msra.mxu0 0.0
    %294 = vmatprep.subr.mxu0 0.0
    %295 = vmatpush1.msra.mxu0 0.0
    %296 = vmatprep.subr.mxu0 0.0
    %297 = vmatpush1.msra.mxu0 0.0
    %298 = vmatprep.subr.mxu0 0.0
    %299 = vmatpush1.msra.mxu0 0.0
    %300 = vmatprep.subr.mxu0 0.0
    %301 = vmatpush1.msra.mxu0 0.0
    %302 = vmatprep.subr.mxu0 0.0
    %303 = vmatpush1.msra.mxu0 0.0
    %304 = vmatprep.subr.mxu0 0.0
    %305 = vmatpush1.msra.mxu0 0.0
    %306 = vmatprep.subr.mxu0 0.0
    %307 = vmatpush1.msra.mxu0 0.0
    %308 = vmatprep.subr.mxu0 0.0
    %309 = vmatpush1.msra.mxu0 0.0
    %310 = vmatprep.subr.mxu0 0.0
    %311 = vmatpush1.msra.mxu0 0.0
    %312 = vmatprep.subr.mxu0 0.0
    %313 = vmatpush1.msra.mxu0 0.0
    %314 = vmatprep.subr.mxu0 0.0
    %315 = vmatpush1.msra.mxu0 %v283
    %316 = vmatprep.subr.mxu0 0.0
    %317 = vmatpush1.msra.mxu0 %v282
    %318 = vmatprep.subr.mxu0 0.0
    %319 = vmatpush2.msra.mxu0 0.0
    %320 = vmatprep.subr.mxu0 0.0
    %321 = vmatpush2.msra.mxu0 0.0
    %322 = vmatprep.subr.mxu0 0.0
    %323 = vmatpush2.msra.mxu0 0.0
    %324 = vmatprep.subr.mxu0 0.0
    %325 = vmatpush2.msra.mxu0 0.0
    %326 = vmatprep.subr.mxu0 0.0
    %327 = vmatpush2.msra.mxu0 0.0
    %328 = vmatprep.subr.mxu0 0.0
    %329 = vmatpush2.msra.mxu0 0.0
    %330 = vmatprep.subr.mxu0 0.0
    %331 = vmatpush2.msra.mxu0 0.0
    %332 = vmatprep.subr.mxu0 0.0
    %333 = vmatpush2.msra.mxu0 0.0
    %334 = vmatprep.subr.mxu0 0.0
    %335 = vmatpush2.msra.mxu0 0.0
    %336 = vmatprep.subr.mxu0 0.0
    %337 = vmatpush2.msra.mxu0 0.0
    %338 = vmatprep.subr.mxu0 0.0
    %339 = vmatpush2.msra.mxu0 0.0
    %340 = vmatprep.subr.mxu0 0.0
    %341 = vmatpush2.msra.mxu0 0.0
    %342 = vmatprep.subr.mxu0 0.0
    %343 = vmatpush2.msra.mxu0 0.0
    %344 = vmatprep.subr.mxu0 0.0
    %345 = vmatpush2.msra.mxu0 0.0
    %346 = vmatprep.subr.mxu0 0.0
    %347 = vmatpush2.msra.mxu0 0.0
    %348 = vmatprep.subr.mxu0 0.0
    %349 = vmatpush2.msra.mxu0 0.0
    %350 = vmatprep.mubr.f32.mxu0 0.0
    %351 = vmatmul.mubr.f32.gmra.mxu0 %v284
    %v352 = vpop.f32.mrf.mxu0
    %v353 = vadd.f32 0.0, %v352
    %v354 = vpop.f32.mrf.mxu0
    %355 = vdwg.mxu0
    %v356 = vadd.f32 %v279, %v353
    %v357 = vld [vmem:[%s6] sm:$0x1]
    %v359 = vlaneseq
    %v360 = vshrl.u32 %v359, 7
    %v361 = vsub.s32 0, %v360
    %v362 = vrot.slane %v357, %v361
    %v364 = vadd.f32 %v356, %v362
    %v365 = vtanh.pop %v364
    %v366 = vld [vmem:[%s7] sm:$0x1]
    %vm367 = vcmask 31744
    %v369 = vsel %vm367, %v366, 0
    %v372 = vsel %vm367, %v365, 0
    %374 = vmatprep.subr.mxu0 0.0
    %375 = vmatpush1.xpose.msra.mxu0 0.0
    %376 = vmatprep.subr.mxu0 0.0
    %377 = vmatpush1.xpose.msra.mxu0 0.0
    %378 = vmatprep.subr.mxu0 0.0
    %379 = vmatpush1.xpose.msra.mxu0 0.0
    %380 = vmatprep.subr.mxu0 0.0
    %381 = vmatpush1.xpose.msra.mxu0 0.0
    %382 = vmatprep.subr.mxu0 0.0
    %383 = vmatpush1.xpose.msra.mxu0 0.0
    %384 = vmatprep.subr.mxu0 0.0
    %385 = vmatpush1.xpose.msra.mxu0 0.0
    %386 = vmatprep.subr.mxu0 0.0
    %387 = vmatpush1.xpose.msra.mxu0 0.0
    %388 = vmatprep.subr.mxu0 0.0
    %389 = vmatpush1.xpose.msra.mxu0 0.0
    %390 = vmatprep.subr.mxu0 0.0
    %391 = vmatpush1.xpose.msra.mxu0 0.0
    %392 = vmatprep.subr.mxu0 0.0
    %393 = vmatpush1.xpose.msra.mxu0 0.0
    %394 = vmatprep.subr.mxu0 0.0
    %395 = vmatpush1.xpose.msra.mxu0 0.0
    %396 = vmatprep.subr.mxu0 0.0
    %397 = vmatpush1.xpose.msra.mxu0 0.0
    %398 = vmatprep.subr.mxu0 0.0
    %399 = vmatpush1.xpose.msra.mxu0 0.0
    %400 = vmatprep.subr.mxu0 0.0
    %401 = vmatpush1.xpose.msra.mxu0 0.0
    %402 = vmatprep.subr.mxu0 0.0
    %403 = vmatpush1.xpose.msra.mxu0 0.0
    %404 = vmatprep.subr.mxu0 0.0
    %405 = vmatpush1.xpose.msra.mxu0 %v372
    %406 = vmatprep.subr.mxu0 0.0
    %407 = vmatpush2.xpose.msra.mxu0 0.0
    %408 = vmatprep.subr.mxu0 0.0
    %409 = vmatpush2.xpose.msra.mxu0 0.0
    %410 = vmatprep.subr.mxu0 0.0
    %411 = vmatpush2.xpose.msra.mxu0 0.0
    %412 = vmatprep.subr.mxu0 0.0
    %413 = vmatpush2.xpose.msra.mxu0 0.0
    %414 = vmatprep.subr.mxu0 0.0
    %415 = vmatpush2.xpose.msra.mxu0 0.0
    %416 = vmatprep.subr.mxu0 0.0
    %417 = vmatpush2.xpose.msra.mxu0 0.0
    %418 = vmatprep.subr.mxu0 0.0
    %419 = vmatpush2.xpose.msra.mxu0 0.0
    %420 = vmatprep.subr.mxu0 0.0
    %421 = vmatpush2.xpose.msra.mxu0 0.0
    %422 = vmatprep.subr.mxu0 0.0
    %423 = vmatpush2.xpose.msra.mxu0 0.0
    %424 = vmatprep.subr.mxu0 0.0
    %425 = vmatpush2.xpose.msra.mxu0 0.0
    %426 = vmatprep.subr.mxu0 0.0
    %427 = vmatpush2.xpose.msra.mxu0 0.0
    %428 = vmatprep.subr.mxu0 0.0
    %429 = vmatpush2.xpose.msra.mxu0 0.0
    %430 = vmatprep.subr.mxu0 0.0
    %431 = vmatpush2.xpose.msra.mxu0 0.0
    %432 = vmatprep.subr.mxu0 0.0
    %433 = vmatpush2.xpose.msra.mxu0 0.0
    %434 = vmatprep.subr.mxu0 0.0
    %435 = vmatpush2.xpose.msra.mxu0 0.0
    %436 = vmatprep.subr.mxu0 0.0
    %437 = vmatpush2.xpose.msra.mxu0 0.0
    %438 = vmatprep.mubr.f32.mxu0 0.0
    %439 = vmatmul.mubr.f32.gmra.mxu0 %v369
    %v440 = vpop.f32.mrf.mxu0
    %v441 = vadd.f32 0.0, %v440
    %v442 = vpop.f32.mrf.mxu0
    %443 = vdwg.mxu0
    %vm444 = vcmask 57344
    %445 = vst.msk [vmem:[#allocation2] sm:$0x1] %vm444, %v441
    // Predicated region
    $region34: #{tpu_custom_call.1} parent=1 // pred_check
      _
    $region35: #{tpu_custom_call.1} parent=1 // pred_check_branch
      %447 = sbr.rel (0) target = $region37
    $region36: #{tpu_custom_call.1} parent=1 // pred_region
      %s449 = ssub.s32 16, 16
      %450 = vsyncadd [#allocation3], %s449
      %s452 = sshll.u32 [#allocation2], 4
      %s453 = int_to_ptr.vmem [resolvable:$true] %s452
      %455 = dma.vmem_to_hbm [thread:$0]  %s453, 16, %s8, [#allocation3]
    $region37: #{tpu_custom_call.1} parent=1 // pred_fallthru
      _
    // Predicated region
    $region38: #{tpu_custom_call.1} parent=1 // pred_check
      _
    $region39: #{tpu_custom_call.1} parent=1 // pred_check_branch
      %457 = sbr.rel (0) target = $region41
    $region40: #{tpu_custom_call.1} parent=1 // pred_region
      %458 = dma.done [#allocation3], 16
    $region41: #{tpu_custom_call.1} parent=1 // pred_fallthru
      _
    %459 = vsyncpa [#allocation3], 1

// kernel: tpu_custom_call.1
$region0: #{tpu_custom_call.1}
  #allocation0 [shape = 'u32[]', space=smem, size = 0x4, offset = 0x4, fixed_abs, tag = 'smem constant byte address 0x4 - core index']
  #allocation1 [shape = 'u32[144,128]{1,0:T(1,128)}', space=vmem, size = 0x12000, scoped, tag = 'internal scratch']
  %s0 = inlined_call_operand.vmem [shape: f32[8,32], index: 0, kind: input, shape index: {}]
  %s1 = inlined_call_operand.vmem [shape: f32[8,16], index: 1, kind: input, shape index: {}]
  %s2 = inlined_call_operand.vmem [shape: f32[32,64], index: 2, kind: input, shape index: {}]
  %s3 = inlined_call_operand.vmem [shape: f32[64,4], index: 3, kind: input, shape index: {}]
  %s4 = inlined_call_operand.vmem [shape: f32[32,4], index: 4, kind: input, shape index: {}]
  %s5 = inlined_call_operand.vmem [shape: f32[16,4], index: 5, kind: input, shape index: {}]
  %s6 = inlined_call_operand.vmem [shape: f32[1,4], index: 6, kind: input, shape index: {}]
  %s7 = inlined_call_operand.vmem [shape: f32[1,4], index: 7, kind: input, shape index: {}]
  %s8 = inlined_call_operand.hbm [shape: f32[1,1,8], index: 8, kind: output, shape index: {}]
  %s9 = sld [smem:[#allocation0]]
  $region42: #{tpu_custom_call.1} parent=0
    _
  %s11 = ssub.s32 1, %s9
  %s12 = scalar_select 0, %s11, %s9
  $region1: #{tpu_custom_call.1} parent=0
    #allocation2 [shape = 'u8[512]{0}', space=vmem, size = 0x400, scoped, tag = 'output window, operand 0, single buffered']
    #allocation3 [shape = 's32[1]{0}', space=sflag, size = 0x4, scoped, tag = 'scoped memory for tpu_custom_call.1']
    %13 = vsyncpa [#allocation3], 0
    // Predicated region
    $region2: #{tpu_custom_call.1} parent=1 // pred_check
      _
    $region3: #{tpu_custom_call.1} parent=1 // pred_check_branch
      %15 = sbr.rel (0) target = $region5
    $region4: #{tpu_custom_call.1} parent=1 // pred_region
      _
    $region5: #{tpu_custom_call.1} parent=1 // pred_fallthru
      _
    // Predicated region
    $region6: #{tpu_custom_call.1} parent=1 // pred_check
      _
    $region7: #{tpu_custom_call.1} parent=1 // pred_check_branch
      %17 = sbr.rel (0) target = $region9
    $region8: #{tpu_custom_call.1} parent=1 // pred_region
      _
    $region9: #{tpu_custom_call.1} parent=1 // pred_fallthru
      _
    // Predicated region
    $region10: #{tpu_custom_call.1} parent=1 // pred_check
      _
    $region11: #{tpu_custom_call.1} parent=1 // pred_check_branch
      %19 = sbr.rel (0) target = $region13
    $region12: #{tpu_custom_call.1} parent=1 // pred_region
      _
    $region13: #{tpu_custom_call.1} parent=1 // pred_fallthru
      _
    // Predicated region
    $region14: #{tpu_custom_call.1} parent=1 // pred_check
      _
    $region15: #{tpu_custom_call.1} parent=1 // pred_check_branch
      %21 = sbr.rel (0) target = $region17
    $region16: #{tpu_custom_call.1} parent=1 // pred_region
      _
    $region17: #{tpu_custom_call.1} parent=1 // pred_fallthru
      _
    // Predicated region
    $region18: #{tpu_custom_call.1} parent=1 // pred_check
      _
    $region19: #{tpu_custom_call.1} parent=1 // pred_check_branch
      %23 = sbr.rel (0) target = $region21
    $region20: #{tpu_custom_call.1} parent=1 // pred_region
      _
    $region21: #{tpu_custom_call.1} parent=1 // pred_fallthru
      _
    // Predicated region
    $region22: #{tpu_custom_call.1} parent=1 // pred_check
      _
    $region23: #{tpu_custom_call.1} parent=1 // pred_check_branch
      %25 = sbr.rel (0) target = $region25
    $region24: #{tpu_custom_call.1} parent=1 // pred_region
      _
    $region25: #{tpu_custom_call.1} parent=1 // pred_fallthru
      _
    // Predicated region
    $region26: #{tpu_custom_call.1} parent=1 // pred_check
      _
    $region27: #{tpu_custom_call.1} parent=1 // pred_check_branch
      %27 = sbr.rel (0) target = $region29
    $region28: #{tpu_custom_call.1} parent=1 // pred_region
      _
    $region29: #{tpu_custom_call.1} parent=1 // pred_fallthru
      _
    // Predicated region
    $region30: #{tpu_custom_call.1} parent=1 // pred_check
      _
    $region31: #{tpu_custom_call.1} parent=1 // pred_check_branch
      %29 = sbr.rel (0) target = $region33
    $region32: #{tpu_custom_call.1} parent=1 // pred_region
      _
    $region33: #{tpu_custom_call.1} parent=1 // pred_fallthru
      _
    %v30 = vld [vmem:[%s0] sm:$0xff]
    %v31 = vld [vmem:[%s1] sm:$0xff]
    %v32 = vld [vmem:[%s2] sm:$0xff]
    %v33 = vld [vmem:[%s2 + $0x8] sm:$0xff]
    %v34 = vld [vmem:[%s2 + $0x10] sm:$0xff]
    %v35 = vld [vmem:[%s2 + $0x18] sm:$0xff]
    %vm36 = vcmask 261120
    %v38 = vsel %vm36, %v30, 0
    %40 = vmatprep.subr.mxu0 0.0
    %41 = vmatpush1.msra.mxu0 0.0
    %42 = vmatprep.subr.mxu0 0.0
    %43 = vmatpush1.msra.mxu0 0.0
    %44 = vmatprep.subr.mxu0 0.0
    %45 = vmatpush1.msra.mxu0 0.0
    %46 = vmatprep.subr.mxu0 0.0
    %47 = vmatpush1.msra.mxu0 0.0
    %48 = vmatprep.subr.mxu0 0.0
    %49 = vmatpush1.msra.mxu0 0.0
    %50 = vmatprep.subr.mxu0 0.0
    %51 = vmatpush1.msra.mxu0 0.0
    %52 = vmatprep.subr.mxu0 0.0
    %53 = vmatpush1.msra.mxu0 0.0
    %54 = vmatprep.subr.mxu0 0.0
    %55 = vmatpush1.msra.mxu0 0.0
    %56 = vmatprep.subr.mxu0 0.0
    %57 = vmatpush1.msra.mxu0 0.0
    %58 = vmatprep.subr.mxu0 0.0
    %59 = vmatpush1.msra.mxu0 0.0
    %60 = vmatprep.subr.mxu0 0.0
    %61 = vmatpush1.msra.mxu0 0.0
    %62 = vmatprep.subr.mxu0 0.0
    %63 = vmatpush1.msra.mxu0 0.0
    %64 = vmatprep.subr.mxu0 0.0
    %65 = vmatpush1.msra.mxu0 %v35
    %66 = vmatprep.subr.mxu0 0.0
    %67 = vmatpush1.msra.mxu0 %v34
    %68 = vmatprep.subr.mxu0 0.0
    %69 = vmatpush1.msra.mxu0 %v33
    %70 = vmatprep.subr.mxu0 0.0
    %71 = vmatpush1.msra.mxu0 %v32
    %72 = vmatprep.subr.mxu0 0.0
    %73 = vmatpush2.msra.mxu0 0.0
    %74 = vmatprep.subr.mxu0 0.0
    %75 = vmatpush2.msra.mxu0 0.0
    %76 = vmatprep.subr.mxu0 0.0
    %77 = vmatpush2.msra.mxu0 0.0
    %78 = vmatprep.subr.mxu0 0.0
    %79 = vmatpush2.msra.mxu0 0.0
    %80 = vmatprep.subr.mxu0 0.0
    %81 = vmatpush2.msra.mxu0 0.0
    %82 = vmatprep.subr.mxu0 0.0
    %83 = vmatpush2.msra.mxu0 0.0
    %84 = vmatprep.subr.mxu0 0.0
    %85 = vmatpush2.msra.mxu0 0.0
    %86 = vmatprep.subr.mxu0 0.0
    %87 = vmatpush2.msra.mxu0 0.0
    %88 = vmatprep.subr.mxu0 0.0
    %89 = vmatpush2.msra.mxu0 0.0
    %90 = vmatprep.subr.mxu0 0.0
    %91 = vmatpush2.msra.mxu0 0.0
    %92 = vmatprep.subr.mxu0 0.0
    %93 = vmatpush2.msra.mxu0 0.0
    %94 = vmatprep.subr.mxu0 0.0
    %95 = vmatpush2.msra.mxu0 0.0
    %96 = vmatprep.subr.mxu0 0.0
    %97 = vmatpush2.msra.mxu0 0.0
    %98 = vmatprep.subr.mxu0 0.0
    %99 = vmatpush2.msra.mxu0 0.0
    %100 = vmatprep.subr.mxu0 0.0
    %101 = vmatpush2.msra.mxu0 0.0
    %102 = vmatprep.subr.mxu0 0.0
    %103 = vmatpush2.msra.mxu0 0.0
    %104 = vmatprep.mubr.f32.mxu0 0.0
    %105 = vmatmul.mubr.f32.gmra.mxu0 %v38
    %v106 = vpop.f32.mrf.mxu0
    %v107 = vadd.f32 0.0, %v106
    %v108 = vpop.f32.mrf.mxu0
    %109 = vdwg.mxu0
    %111 = vrot.lane.b32.xlu0 %v31, 16
    %v112 = vpop.permute.xlu0 %111
    %114 = vrot.lane.b32.xlu0 %v31, 32
    %v115 = vpop.permute.xlu0 %114
    %117 = vrot.lane.b32.xlu0 %v31, 48
    %v118 = vpop.permute.xlu0 %117
    %vm120 = vcmask 130048
    %v121 = vsel %vm120, %v31, %v112
    %v122 = vsel %vm36, %v121, %v115
    %vm123 = vcmask 392192
    %v124 = vsel %vm123, %v122, %v118
    %v125 = vmul.f32 %v107, %v124
    %v126 = vld [vmem:[%s3] sm:$0xff]
    %v127 = vld [vmem:[%s3 + $0x8] sm:$0xff]
    %v128 = vld [vmem:[%s3 + $0x10] sm:$0xff]
    %v129 = vld [vmem:[%s3 + $0x18] sm:$0xff]
    %v130 = vld [vmem:[%s3 + $0x20] sm:$0xff]
    %v131 = vld [vmem:[%s3 + $0x28] sm:$0xff]
    %v132 = vld [vmem:[%s3 + $0x30] sm:$0xff]
    %v133 = vld [vmem:[%s3 + $0x38] sm:$0xff]
    %v134 = vld [vmem:[%s4] sm:$0xff]
    %v135 = vld [vmem:[%s4 + $0x8] sm:$0xff]
    %v136 = vld [vmem:[%s4 + $0x10] sm:$0xff]
    %v137 = vld [vmem:[%s4 + $0x18] sm:$0xff]
    %138 = vmatprep.subr.mxu0 0.0
    %139 = vmatpush1.msra.mxu0 0.0
    %140 = vmatprep.subr.mxu0 0.0
    %141 = vmatpush1.msra.mxu0 0.0
    %142 = vmatprep.subr.mxu0 0.0
    %143 = vmatpush1.msra.mxu0 0.0
    %144 = vmatprep.subr.mxu0 0.0
    %145 = vmatpush1.msra.mxu0 0.0
    %146 = vmatprep.subr.mxu0 0.0
    %147 = vmatpush1.msra.mxu0 0.0
    %148 = vmatprep.subr.mxu0 0.0
    %149 = vmatpush1.msra.mxu0 0.0
    %150 = vmatprep.subr.mxu0 0.0
    %151 = vmatpush1.msra.mxu0 0.0
    %152 = vmatprep.subr.mxu0 0.0
    %153 = vmatpush1.msra.mxu0 0.0
    %154 = vmatprep.subr.mxu0 0.0
    %155 = vmatpush1.msra.mxu0 0.0
    %156 = vmatprep.subr.mxu0 0.0
    %157 = vmatpush1.msra.mxu0 0.0
    %158 = vmatprep.subr.mxu0 0.0
    %159 = vmatpush1.msra.mxu0 0.0
    %160 = vmatprep.subr.mxu0 0.0
    %161 = vmatpush1.msra.mxu0 0.0
    %162 = vmatprep.subr.mxu0 0.0
    %163 = vmatpush1.msra.mxu0 %v137
    %164 = vmatprep.subr.mxu0 0.0
    %165 = vmatpush1.msra.mxu0 %v136
    %166 = vmatprep.subr.mxu0 0.0
    %167 = vmatpush1.msra.mxu0 %v135
    %168 = vmatprep.subr.mxu0 0.0
    %169 = vmatpush1.msra.mxu0 %v134
    %170 = vmatprep.subr.mxu0 0.0
    %171 = vmatpush2.msra.mxu0 0.0
    %172 = vmatprep.subr.mxu0 0.0
    %173 = vmatpush2.msra.mxu0 0.0
    %174 = vmatprep.subr.mxu0 0.0
    %175 = vmatpush2.msra.mxu0 0.0
    %176 = vmatprep.subr.mxu0 0.0
    %177 = vmatpush2.msra.mxu0 0.0
    %178 = vmatprep.subr.mxu0 0.0
    %179 = vmatpush2.msra.mxu0 0.0
    %180 = vmatprep.subr.mxu0 0.0
    %181 = vmatpush2.msra.mxu0 0.0
    %182 = vmatprep.subr.mxu0 0.0
    %183 = vmatpush2.msra.mxu0 0.0
    %184 = vmatprep.subr.mxu0 0.0
    %185 = vmatpush2.msra.mxu0 0.0
    %186 = vmatprep.subr.mxu0 0.0
    %187 = vmatpush2.msra.mxu0 0.0
    %188 = vmatprep.subr.mxu0 0.0
    %189 = vmatpush2.msra.mxu0 0.0
    %190 = vmatprep.subr.mxu0 0.0
    %191 = vmatpush2.msra.mxu0 0.0
    %192 = vmatprep.subr.mxu0 0.0
    %193 = vmatpush2.msra.mxu0 0.0
    %194 = vmatprep.subr.mxu0 0.0
    %195 = vmatpush2.msra.mxu0 0.0
    %196 = vmatprep.subr.mxu0 0.0
    %197 = vmatpush2.msra.mxu0 0.0
    %198 = vmatprep.subr.mxu0 0.0
    %199 = vmatpush2.msra.mxu0 0.0
    %200 = vmatprep.subr.mxu0 0.0
    %201 = vmatpush2.msra.mxu0 0.0
    %202 = vmatprep.mubr.f32.mxu0 0.0
    %203 = vmatmul.mubr.f32.gmra.mxu0 %v38
    %v204 = vpop.f32.mrf.mxu0
    %v205 = vadd.f32 0.0, %v204
    %v206 = vpop.f32.mrf.mxu0
    %207 = vdwg.mxu0
    %vm208 = vcmask 523264
    %v210 = vsel %vm208, %v125, 0
    %212 = vmatprep.subr.mxu0 0.0
    %213 = vmatpush1.msra.mxu0 0.0
    %214 = vmatprep.subr.mxu0 0.0
    %215 = vmatpush1.msra.mxu0 0.0
    %216 = vmatprep.subr.mxu0 0.0
    %217 = vmatpush1.msra.mxu0 0.0
    %218 = vmatprep.subr.mxu0 0.0
    %219 = vmatpush1.msra.mxu0 0.0
    %220 = vmatprep.subr.mxu0 0.0
    %221 = vmatpush1.msra.mxu0 0.0
    %222 = vmatprep.subr.mxu0 0.0
    %223 = vmatpush1.msra.mxu0 0.0
    %224 = vmatprep.subr.mxu0 0.0
    %225 = vmatpush1.msra.mxu0 0.0
    %226 = vmatprep.subr.mxu0 0.0
    %227 = vmatpush1.msra.mxu0 0.0
    %228 = vmatprep.subr.mxu0 0.0
    %229 = vmatpush1.msra.mxu0 %v133
    %230 = vmatprep.subr.mxu0 0.0
    %231 = vmatpush1.msra.mxu0 %v132
    %232 = vmatprep.subr.mxu0 0.0
    %233 = vmatpush1.msra.mxu0 %v131
    %234 = vmatprep.subr.mxu0 0.0
    %235 = vmatpush1.msra.mxu0 %v130
    %236 = vmatprep.subr.mxu0 0.0
    %237 = vmatpush1.msra.mxu0 %v129
    %238 = vmatprep.subr.mxu0 0.0
    %239 = vmatpush1.msra.mxu0 %v128
    %240 = vmatprep.subr.mxu0 0.0
    %241 = vmatpush1.msra.mxu0 %v127
    %242 = vmatprep.subr.mxu0 0.0
    %243 = vmatpush1.msra.mxu0 %v126
    %244 = vmatprep.subr.mxu0 0.0
    %245 = vmatpush2.msra.mxu0 0.0
    %246 = vmatprep.subr.mxu0 0.0
    %247 = vmatpush2.msra.mxu0 0.0
    %248 = vmatprep.subr.mxu0 0.0
    %249 = vmatpush2.msra.mxu0 0.0
    %250 = vmatprep.subr.mxu0 0.0
    %251 = vmatpush2.msra.mxu0 0.0
    %252 = vmatprep.subr.mxu0 0.0
    %253 = vmatpush2.msra.mxu0 0.0
    %254 = vmatprep.subr.mxu0 0.0
    %255 = vmatpush2.msra.mxu0 0.0
    %256 = vmatprep.subr.mxu0 0.0
    %257 = vmatpush2.msra.mxu0 0.0
    %258 = vmatprep.subr.mxu0 0.0
    %259 = vmatpush2.msra.mxu0 0.0
    %260 = vmatprep.subr.mxu0 0.0
    %261 = vmatpush2.msra.mxu0 0.0
    %262 = vmatprep.subr.mxu0 0.0
    %263 = vmatpush2.msra.mxu0 0.0
    %264 = vmatprep.subr.mxu0 0.0
    %265 = vmatpush2.msra.mxu0 0.0
    %266 = vmatprep.subr.mxu0 0.0
    %267 = vmatpush2.msra.mxu0 0.0
    %268 = vmatprep.subr.mxu0 0.0
    %269 = vmatpush2.msra.mxu0 0.0
    %270 = vmatprep.subr.mxu0 0.0
    %271 = vmatpush2.msra.mxu0 0.0
    %272 = vmatprep.subr.mxu0 0.0
    %273 = vmatpush2.msra.mxu0 0.0
    %274 = vmatprep.subr.mxu0 0.0
    %275 = vmatpush2.msra.mxu0 0.0
    %276 = vmatprep.mubr.f32.mxu0 0.0
    %277 = vmatmul.mubr.f32.gmra.mxu0 %v210
    %v278 = vpop.f32.mrf.mxu0
    %v279 = vadd.f32 %v205, %v278
    %v280 = vpop.f32.mrf.mxu0
    %281 = vdwg.mxu0
    %v282 = vld [vmem:[%s5] sm:$0xff]
    %v283 = vld [vmem:[%s5 + $0x8] sm:$0xff]
    %v284 = vsel %vm120, %v31, 0
    %286 = vmatprep.subr.mxu0 0.0
    %287 = vmatpush1.msra.mxu0 0.0
    %288 = vmatprep.subr.mxu0 0.0
    %289 = vmatpush1.msra.mxu0 0.0
    %290 = vmatprep.subr.mxu0 0.0
    %291 = vmatpush1.msra.mxu0 0.0
    %292 = vmatprep.subr.mxu0 0.0
    %293 = vmatpush1.msra.mxu0 0.0
    %294 = vmatprep.subr.mxu0 0.0
    %295 = vmatpush1.msra.mxu0 0.0
    %296 = vmatprep.subr.mxu0 0.0
    %297 = vmatpush1.msra.mxu0 0.0
    %298 = vmatprep.subr.mxu0 0.0
    %299 = vmatpush1.msra.mxu0 0.0
    %300 = vmatprep.subr.mxu0 0.0
    %301 = vmatpush1.msra.mxu0 0.0
    %302 = vmatprep.subr.mxu0 0.0
    %303 = vmatpush1.msra.mxu0 0.0
    %304 = vmatprep.subr.mxu0 0.0
    %305 = vmatpush1.msra.mxu0 0.0
    %306 = vmatprep.subr.mxu0 0.0
    %307 = vmatpush1.msra.mxu0 0.0
    %308 = vmatprep.subr.mxu0 0.0
    %309 = vmatpush1.msra.mxu0 0.0
    %310 = vmatprep.subr.mxu0 0.0
    %311 = vmatpush1.msra.mxu0 0.0
    %312 = vmatprep.subr.mxu0 0.0
    %313 = vmatpush1.msra.mxu0 0.0
    %314 = vmatprep.subr.mxu0 0.0
    %315 = vmatpush1.msra.mxu0 %v283
    %316 = vmatprep.subr.mxu0 0.0
    %317 = vmatpush1.msra.mxu0 %v282
    %318 = vmatprep.subr.mxu0 0.0
    %319 = vmatpush2.msra.mxu0 0.0
    %320 = vmatprep.subr.mxu0 0.0
    %321 = vmatpush2.msra.mxu0 0.0
    %322 = vmatprep.subr.mxu0 0.0
    %323 = vmatpush2.msra.mxu0 0.0
    %324 = vmatprep.subr.mxu0 0.0
    %325 = vmatpush2.msra.mxu0 0.0
    %326 = vmatprep.subr.mxu0 0.0
    %327 = vmatpush2.msra.mxu0 0.0
    %328 = vmatprep.subr.mxu0 0.0
    %329 = vmatpush2.msra.mxu0 0.0
    %330 = vmatprep.subr.mxu0 0.0
    %331 = vmatpush2.msra.mxu0 0.0
    %332 = vmatprep.subr.mxu0 0.0
    %333 = vmatpush2.msra.mxu0 0.0
    %334 = vmatprep.subr.mxu0 0.0
    %335 = vmatpush2.msra.mxu0 0.0
    %336 = vmatprep.subr.mxu0 0.0
    %337 = vmatpush2.msra.mxu0 0.0
    %338 = vmatprep.subr.mxu0 0.0
    %339 = vmatpush2.msra.mxu0 0.0
    %340 = vmatprep.subr.mxu0 0.0
    %341 = vmatpush2.msra.mxu0 0.0
    %342 = vmatprep.subr.mxu0 0.0
    %343 = vmatpush2.msra.mxu0 0.0
    %344 = vmatprep.subr.mxu0 0.0
    %345 = vmatpush2.msra.mxu0 0.0
    %346 = vmatprep.subr.mxu0 0.0
    %347 = vmatpush2.msra.mxu0 0.0
    %348 = vmatprep.subr.mxu0 0.0
    %349 = vmatpush2.msra.mxu0 0.0
    %350 = vmatprep.mubr.f32.mxu0 0.0
    %351 = vmatmul.mubr.f32.gmra.mxu0 %v284
    %v352 = vpop.f32.mrf.mxu0
    %v353 = vadd.f32 0.0, %v352
    %v354 = vpop.f32.mrf.mxu0
    %355 = vdwg.mxu0
    %v356 = vadd.f32 %v279, %v353
    %v357 = vld [vmem:[%s6] sm:$0x1]
    %v359 = vlaneseq
    %v360 = vshrl.u32 %v359, 7
    %v361 = vsub.s32 0, %v360
    %v362 = vrot.slane %v357, %v361
    %v364 = vadd.f32 %v356, %v362
    %v365 = vtanh.pop %v364
    %v366 = vld [vmem:[%s7] sm:$0x1]
    %vm367 = vcmask 31744
    %v369 = vsel %vm367, %v366, 0
    %v372 = vsel %vm367, %v365, 0
    %374 = vmatprep.subr.mxu0 0.0
    %375 = vmatpush1.xpose.msra.mxu0 0.0
    %376 = vmatprep.subr.mxu0 0.0
    %377 = vmatpush1.xpose.msra.mxu0 0.0
    %378 = vmatprep.subr.mxu0 0.0
    %379 = vmatpush1.xpose.msra.mxu0 0.0
    %380 = vmatprep.subr.mxu0 0.0
    %381 = vmatpush1.xpose.msra.mxu0 0.0
    %382 = vmatprep.subr.mxu0 0.0
    %383 = vmatpush1.xpose.msra.mxu0 0.0
    %384 = vmatprep.subr.mxu0 0.0
    %385 = vmatpush1.xpose.msra.mxu0 0.0
    %386 = vmatprep.subr.mxu0 0.0
    %387 = vmatpush1.xpose.msra.mxu0 0.0
    %388 = vmatprep.subr.mxu0 0.0
    %389 = vmatpush1.xpose.msra.mxu0 0.0
    %390 = vmatprep.subr.mxu0 0.0
    %391 = vmatpush1.xpose.msra.mxu0 0.0
    %392 = vmatprep.subr.mxu0 0.0
    %393 = vmatpush1.xpose.msra.mxu0 0.0
    %394 = vmatprep.subr.mxu0 0.0
    %395 = vmatpush1.xpose.msra.mxu0 0.0
    %396 = vmatprep.subr.mxu0 0.0
    %397 = vmatpush1.xpose.msra.mxu0 0.0
    %398 = vmatprep.subr.mxu0 0.0
    %399 = vmatpush1.xpose.msra.mxu0 0.0
    %400 = vmatprep.subr.mxu0 0.0
    %401 = vmatpush1.xpose.msra.mxu0 0.0
    %402 = vmatprep.subr.mxu0 0.0
    %403 = vmatpush1.xpose.msra.mxu0 0.0
    %404 = vmatprep.subr.mxu0 0.0
    %405 = vmatpush1.xpose.msra.mxu0 %v372
    %406 = vmatprep.subr.mxu0 0.0
    %407 = vmatpush2.xpose.msra.mxu0 0.0
    %408 = vmatprep.subr.mxu0 0.0
    %409 = vmatpush2.xpose.msra.mxu0 0.0
    %410 = vmatprep.subr.mxu0 0.0
    %411 = vmatpush2.xpose.msra.mxu0 0.0
    %412 = vmatprep.subr.mxu0 0.0
    %413 = vmatpush2.xpose.msra.mxu0 0.0
    %414 = vmatprep.subr.mxu0 0.0
    %415 = vmatpush2.xpose.msra.mxu0 0.0
    %416 = vmatprep.subr.mxu0 0.0
    %417 = vmatpush2.xpose.msra.mxu0 0.0
    %418 = vmatprep.subr.mxu0 0.0
    %419 = vmatpush2.xpose.msra.mxu0 0.0
    %420 = vmatprep.subr.mxu0 0.0
    %421 = vmatpush2.xpose.msra.mxu0 0.0
    %422 = vmatprep.subr.mxu0 0.0
    %423 = vmatpush2.xpose.msra.mxu0 0.0
    %424 = vmatprep.subr.mxu0 0.0
    %425 = vmatpush2.xpose.msra.mxu0 0.0
    %426 = vmatprep.subr.mxu0 0.0
    %427 = vmatpush2.xpose.msra.mxu0 0.0
    %428 = vmatprep.subr.mxu0 0.0
    %429 = vmatpush2.xpose.msra.mxu0 0.0
    %430 = vmatprep.subr.mxu0 0.0
    %431 = vmatpush2.xpose.msra.mxu0 0.0
    %432 = vmatprep.subr.mxu0 0.0
    %433 = vmatpush2.xpose.msra.mxu0 0.0
    %434 = vmatprep.subr.mxu0 0.0
    %435 = vmatpush2.xpose.msra.mxu0 0.0
    %436 = vmatprep.subr.mxu0 0.0
    %437 = vmatpush2.xpose.msra.mxu0 0.0
    %438 = vmatprep.mubr.f32.mxu0 0.0
    %439 = vmatmul.mubr.f32.gmra.mxu0 %v369
    %v440 = vpop.f32.mrf.mxu0
    %v441 = vadd.f32 0.0, %v440
    %v442 = vpop.f32.mrf.mxu0
    %443 = vdwg.mxu0
    %vm444 = vcmask 57344
    %445 = vst.msk [vmem:[#allocation2] sm:$0x1] %vm444, %v441
    // Predicated region
    $region34: #{tpu_custom_call.1} parent=1 // pred_check
      _
    $region35: #{tpu_custom_call.1} parent=1 // pred_check_branch
      %447 = sbr.rel (0) target = $region37
    $region36: #{tpu_custom_call.1} parent=1 // pred_region
      %s449 = ssub.s32 16, 16
      %450 = vsyncadd [#allocation3], %s449
      %s452 = sshll.u32 [#allocation2], 4
      %s453 = int_to_ptr.vmem [resolvable:$true] %s452
      %455 = dma.vmem_to_hbm [thread:$0]  %s453, 16, %s8, [#allocation3]
    $region37: #{tpu_custom_call.1} parent=1 // pred_fallthru
      _
    // Predicated region
    $region38: #{tpu_custom_call.1} parent=1 // pred_check
      _
    $region39: #{tpu_custom_call.1} parent=1 // pred_check_branch
      %457 = sbr.rel (0) target = $region41
    $region40: #{tpu_custom_call.1} parent=1 // pred_region
      %458 = dma.done [#allocation3], 16
    $region41: #{tpu_custom_call.1} parent=1 // pred_fallthru
      _
    %459 = vsyncpa [#allocation3], 1

</llo_original>
